<compile_context>
chip_gen: v6e
topology: v6e:2x2x1
jax: 0.10.0
libtpu: 0.0.40
codegen_flags: <defaults>
</compile_context>

<pallas_src>
import functools

import jax
import jax.numpy as jnp
from jax.experimental import pallas as pl
from jax.experimental.pallas import tpu as pltpu

EPS = 1e-5


def _round_up(n, m):
    return (n + m - 1) // m * m


def _vmem_limit_bytes():
    """Safe VMEM limit derived from hardware; None -> compiler default."""
    try:
        cap = getattr(pltpu.get_tpu_info(), "vmem_capacity_bytes", None)
    except Exception:
        cap = None
    if not cap:
        return None
    cap = int(cap)
    if cap <= (48 << 20):
        return None
    # Leave 16 MiB headroom: v5e/v6e -> 112 MiB, v7x -> 48 MiB.
    return cap - (16 << 20)


def _params(dimension_semantics=None):
    kw = {}
    lim = _vmem_limit_bytes()
    if lim is not None:
        kw["vmem_limit_bytes"] = lim
    if dimension_semantics is not None:
        kw["dimension_semantics"] = dimension_semantics
    return pltpu.CompilerParams(**kw)


# --------------------------------------------------------------------------- #
# Path A: single-block fused kernel (whole batch resident in VMEM).
# --------------------------------------------------------------------------- #
def _fused_kernel(x_ref, w1_ref, g1_ref, beta1_ref, w2_ref, o_ref):
    inv_n = jnp.float32(1.0 / x_ref.shape[0])

    # ---- Linear 1 (MXU); bias dropped: cancelled by BN1 mean subtraction ----
    h = jnp.dot(x_ref[...], w1_ref[...], preferred_element_type=jnp.float32)

    # ---- BatchNorm1d(hidden): one-pass stats, fused scale/shift ----
    mu1 = jnp.sum(h, axis=0, keepdims=True) * inv_n
    var1 = jnp.maximum(jnp.sum(h * h, axis=0, keepdims=True) * inv_n - mu1 * mu1, 0.0)
    scale1 = g1_ref[...] * jax.lax.rsqrt(var1 + EPS)          # EUP
    shift1 = beta1_ref[...] - mu1 * scale1
    h = jnp.maximum(h * scale1 + shift1, 0.0)                  # BN + ReLU fused

    # ---- Linear 2 (MXU); bias dropped: cancelled by BN2 mean subtraction ----
    y = jnp.dot(h.astype(w2_ref.dtype), w2_ref[...], preferred_element_type=jnp.float32)

    # ---- BatchNorm1d(out, affine=False) ----
    mu2 = jnp.sum(y, axis=0, keepdims=True) * inv_n
    var2 = jnp.maximum(jnp.sum(y * y, axis=0, keepdims=True) * inv_n - mu2 * mu2, 0.0)
    o_ref[...] = ((y - mu2) * jax.lax.rsqrt(var2 + EPS)).astype(o_ref.dtype)


def _global_embedding_fused(xp, w1p, g1p, beta1p, w2p, out_dtype):
    B = xp.shape[0]
    OUTp = w2p.shape[1]
    full = lambda a: pl.BlockSpec(a.shape, lambda: (0,) * a.ndim)
    return pl.pallas_call(
        _fused_kernel,
        out_shape=jax.ShapeDtypeStruct((B, OUTp), out_dtype),
        grid=(),  # single block: whole batch resident (BN needs full-batch stats)
        in_specs=[full(xp), full(w1p), full(g1p), full(beta1p), full(w2p)],
        out_specs=pl.BlockSpec((B, OUTp), lambda: (0, 0)),
        compiler_params=_params(),
    )(xp, w1p, g1p, beta1p, w2p)


# --------------------------------------------------------------------------- #
# Path B: batch-tiled 3-stage pipeline with streaming sufficient statistics.
# --------------------------------------------------------------------------- #
def _stage1_kernel(x_ref, w1_ref, h_ref, sum1_ref, ssq1_ref):
    i = pl.program_id(0)
    h = jnp.dot(x_ref[...], w1_ref[...], preferred_element_type=jnp.float32)
    h_ref[...] = h.astype(h_ref.dtype)

    @pl.when(i == 0)
    def _():
        sum1_ref[...] = jnp.zeros_like(sum1_ref)
        ssq1_ref[...] = jnp.zeros_like(ssq1_ref)

    # Padded batch rows are all-zero in x, so they contribute 0 to both sums.
    sum1_ref[...] += jnp.sum(h, axis=0, keepdims=True)
    ssq1_ref[...] += jnp.sum(h * h, axis=0, keepdims=True)


def _stage2_kernel(s1_ref, t1_ref, h_ref, w2_ref, y_ref, sum2_ref, ssq2_ref,
                   *, n_valid, tile_b):
    i = pl.program_id(0)
    h = h_ref[...].astype(jnp.float32) * s1_ref[...] + t1_ref[...]   # fused BN1
    h = jnp.maximum(h, 0.0)                                          # ReLU
    y = jnp.dot(h.astype(w2_ref.dtype), w2_ref[...], preferred_element_type=jnp.float32)
    y_ref[...] = y

    @pl.when(i == 0)
    def _():
        sum2_ref[...] = jnp.zeros_like(sum2_ref)
        ssq2_ref[...] = jnp.zeros_like(ssq2_ref)

    # Mask padded batch rows (the BN1 shift makes them non-zero) out of the stats.
    row = i * tile_b + jax.lax.broadcasted_iota(jnp.int32, (tile_b, 1), 0)
    ym = jnp.where(row < n_valid, y, 0.0)
    sum2_ref[...] += jnp.sum(ym, axis=0, keepdims=True)
    ssq2_ref[...] += jnp.sum(ym * ym, axis=0, keepdims=True)


def _stage3_kernel(s2_ref, t2_ref, y_ref, o_ref):
    o_ref[...] = (y_ref[...] * s2_ref[...] + t2_ref[...]).astype(o_ref.dtype)


def _global_embedding_tiled(xp, w1p, g1p, beta1p, w2p, n_valid, tile_b, out_dtype):
    Bp, INp = xp.shape
    Hp = w1p.shape[1]
    OUTp = w2p.shape[1]
    nb = Bp // tile_b
    cdt = w1p.dtype

    row_spec = lambda width: pl.BlockSpec((tile_b, width), lambda i: (i, 0))
    fixed = lambda a: pl.BlockSpec(a.shape, lambda i: (0,) * a.ndim)

    # ---- Stage 1: h = x @ W1 (batch tiled) + streaming sum / sumsq of h ----
    h, sum1, ssq1 = pl.pallas_call(
        _stage1_kernel,
        out_shape=(jax.ShapeDtypeStruct((Bp, Hp), cdt),
                   jax.ShapeDtypeStruct((1, Hp), jnp.float32),
                   jax.ShapeDtypeStruct((1, Hp), jnp.float32)),
        grid=(nb,),
        in_specs=[row_spec(INp), fixed(w1p)],
        out_specs=(row_spec(Hp),
                   pl.BlockSpec((1, Hp), lambda i: (0, 0)),
                   pl.BlockSpec((1, Hp), lambda i: (0, 0))),
        compiler_params=_params(("arbitrary",)),
    )(xp, w1p)

    inv_n = jnp.float32(1.0 / n_valid)
    mu1 = sum1 * inv_n
    var1 = jnp.maximum(ssq1 * inv_n - mu1 * mu1, 0.0)
    s1 = g1p * jax.lax.rsqrt(var1 + EPS)
    t1 = beta1p - mu1 * s1

    # ---- Stage 2: fused BN1 + ReLU + y = h @ W2 + streaming stats of y ----
    y, sum2, ssq2 = pl.pallas_call(
        functools.partial(_stage2_kernel, n_valid=n_valid, tile_b=tile_b),
        out_shape=(jax.ShapeDtypeStruct((Bp, OUTp), jnp.float32),
                   jax.ShapeDtypeStruct((1, OUTp), jnp.float32),
                   jax.ShapeDtypeStruct((1, OUTp), jnp.float32)),
        grid=(nb,),
        in_specs=[pl.BlockSpec((1, Hp), lambda i: (0, 0)),
                  pl.BlockSpec((1, Hp), lambda i: (0, 0)),
                  row_spec(Hp), fixed(w2p)],
        out_specs=(row_spec(OUTp),
                   pl.BlockSpec((1, OUTp), lambda i: (0, 0)),
                   pl.BlockSpec((1, OUTp), lambda i: (0, 0))),
        compiler_params=_params(("arbitrary",)),
    )(s1, t1, h, w2p)

    mu2 = sum2 * inv_n
    var2 = jnp.maximum(ssq2 * inv_n - mu2 * mu2, 0.0)
    s2 = jax.lax.rsqrt(var2 + EPS)
    t2 = -mu2 * s2

    # ---- Stage 3: BN2 normalize (batch-parallel; can use both v7x TCs) ----
    out = pl.pallas_call(
        _stage3_kernel,
        out_shape=jax.ShapeDtypeStruct((Bp, OUTp), out_dtype),
        grid=(nb,),
        in_specs=[pl.BlockSpec((1, OUTp), lambda i: (0, 0)),
                  pl.BlockSpec((1, OUTp), lambda i: (0, 0)),
                  row_spec(OUTp)],
        out_specs=row_spec(OUTp),
        compiler_params=_params(("parallel",)),
    )(s2, t2, y)
    return out


# --------------------------------------------------------------------------- #
# Public wrapper.
# --------------------------------------------------------------------------- #
def global_embedding(x, w1, b1, g1, beta1, w2, b2, *,
                     compute_dtype=jnp.bfloat16, tiled=None, batch_tile=512):
    """Forward of GlobalEmbedding: Linear -> BN(train) -> ReLU -> Linear -> BN(train, no affine).

    b1 / b2 are accepted for parity with the PyTorch module but are not sent to
    the device kernels: a per-feature bias is exactly cancelled by the mean
    subtraction of the immediately following training-mode BatchNorm.
    """
    del b1, b2  # algebraically exact elimination (see docstring)

    B, IN = x.shape
    HID = w1.shape[1]
    OUT = w2.shape[1]
    INp, Hp, OUTp = _round_up(IN, 128), _round_up(HID, 128), _round_up(OUT, 128)

    cdt = jnp.dtype(compute_dtype)
    f32 = jnp.float32

    # Lane-dense, zero-padded operands (exact: zero rows/cols contribute nothing,
    # padded output columns normalize to 0 and are sliced off).
    w1p = jnp.zeros((INp, Hp), cdt).at[:IN, :HID].set(w1.astype(cdt))
    w2p = jnp.zeros((Hp, OUTp), cdt).at[:HID, :OUT].set(w2.astype(cdt))
    g1p = jnp.zeros((1, Hp), f32).at[:, :HID].set(g1.reshape(1, HID).astype(f32))
    beta1p = jnp.zeros((1, Hp), f32).at[:, :HID].set(beta1.reshape(1, HID).astype(f32))

    if tiled is None:
        # Rough single-block VMEM footprint: operands + f32 h/y/out + slack.
        need = (B * INp + INp * Hp + Hp * OUTp) * cdt.itemsize \
               + 4 * B * (Hp + 2 * OUTp) + (4 << 20)
        budget = (_vmem_limit_bytes() or (32 << 20)) // 2
        tiled = need > budget

    if not tiled:
        xp = jnp.zeros((B, INp), cdt).at[:, :IN].set(x.astype(cdt))
        out = _global_embedding_fused(xp, w1p, g1p, beta1p, w2p, f32)
        return out[:, :OUT]

    tb = max(8, min(_round_up(batch_tile, 8), _round_up(B, 8)))
    Bp = _round_up(B, tb)
    xp = jnp.zeros((Bp, INp), cdt).at[:B, :IN].set(x.astype(cdt))
    out = _global_embedding_tiled(xp, w1p, g1p, beta1p, w2p, B, tb, f32)
    return out[:B, :OUT]


# --------------------------------------------------------------------------- #
# Pure-JAX reference (exact module semantics, f32, biases included).
# --------------------------------------------------------------------------- #
def reference(x, w1, b1, g1, beta1, w2, b2):
    hp = jax.lax.Precision.HIGHEST
    h = jnp.dot(x, w1, precision=hp) + b1
    mu1 = h.mean(0, keepdims=True)
    var1 = ((h - mu1) ** 2).mean(0, keepdims=True)
    h = (h - mu1) / jnp.sqrt(var1 + EPS) * g1 + beta1
    h = jnp.maximum(h, 0.0)
    y = jnp.dot(h, w2, precision=hp) + b2
    mu2 = y.mean(0, keepdims=True)
    var2 = ((y - mu2) ** 2).mean(0, keepdims=True)
    return (y - mu2) / jnp.sqrt(var2 + EPS)


if __name__ == "__main__":
    # Small shapes consistent with the module (input_dim -> hidden_dim -> output_dim).
    # B=10 deliberately exercises batch padding + masked stats in the tiled path.
    B, IN, HID, OUT = 10, 32, 64, 32
    key = jax.random.PRNGKey(0)
    k_x, k_w1, k_b1, k_g1, k_bt1, k_w2, k_b2 = jax.random.split(key, 7)

    x = jax.random.normal(k_x, (B, IN), jnp.float32)

    # PyTorch-style Linear init: U(-1/sqrt(fan_in), 1/sqrt(fan_in)); weights stored (in, out).
    lim1 = 1.0 / (IN ** 0.5)
    w1 = jax.random.uniform(k_w1, (IN, HID), jnp.float32, -lim1, lim1)
    b1 = jax.random.uniform(k_b1, (1, HID), jnp.float32, -lim1, lim1)
    g1 = 1.0 + 0.1 * jax.random.normal(k_g1, (1, HID), jnp.float32)
    beta1 = 0.1 * jax.random.normal(k_bt1, (1, HID), jnp.float32)

    lim2 = 1.0 / (HID ** 0.5)
    w2 = jax.random.uniform(k_w2, (HID, OUT), jnp.float32, -lim2, lim2)
    b2 = jax.random.uniform(k_b2, (1, OUT), jnp.float32, -lim2, lim2)

    ref = reference(x, w1, b1, g1, beta1, w2, b2)

    # 1) f32 single-block fused path — strict correctness check.
    out_f = jax.block_until_ready(global_embedding(
        x, w1, b1, g1, beta1, w2, b2, compute_dtype=jnp.float32, tiled=False))
    assert out_f.shape == (B, OUT)
    assert jnp.allclose(out_f, ref, atol=1e-2, rtol=1e-2), "fused f32 mismatch"

    # 2) f32 batch-tiled 3-stage path (multi-tile grid + masked stats) — strict check.
    out_ft = jax.block_until_ready(global_embedding(
        x, w1, b1, g1, beta1, w2, b2, compute_dtype=jnp.float32, tiled=True, batch_tile=8))
    assert out_ft.shape == (B, OUT)
    assert jnp.allclose(out_ft, ref, atol=1e-2, rtol=1e-2), "tiled f32 mismatch"

    # 3) Default bf16-operand fast paths — sanity check vs f32 reference (loose:
    #    bf16 matmul-operand rounding; strict correctness is established above).
    out_b = jax.block_until_ready(global_embedding(
        x, w1, b1, g1, beta1, w2, b2, tiled=False))
    assert jnp.allclose(out_b, ref, atol=0.15, rtol=0.1), "fused bf16 mismatch"
    out_bt = jax.block_until_ready(global_embedding(
        x, w1, b1, g1, beta1, w2, b2, tiled=True, batch_tile=8))
    assert jnp.allclose(out_bt, ref, atol=0.15, rtol=0.1), "tiled bf16 mismatch"

    print("KERNEL_OK")
</pallas_src>

<mosaic_0001>
module attributes {stable_mosaic.version = 11 : i64} {
  func.func @_fused_kernel(%arg0: memref<10x128xf32, #tpu.memory_space<vmem>>, %arg1: memref<128x128xf32, #tpu.memory_space<vmem>>, %arg2: memref<1x128xf32, #tpu.memory_space<vmem>>, %arg3: memref<1x128xf32, #tpu.memory_space<vmem>>, %arg4: memref<128x128xf32, #tpu.memory_space<vmem>>, %arg5: memref<10x128xf32, #tpu.memory_space<vmem>>) attributes {dimension_semantics = [], scalar_prefetch = 0 : i64, scratch_operands = 0 : i64, tpu.core_type = #tpu.core_type<tc>} {
    %c0 = arith.constant 0 : index
    %c0_0 = arith.constant 0 : index
    %0 = vector.load %arg0[%c0, %c0_0] : memref<10x128xf32, #tpu.memory_space<vmem>>, vector<10x128xf32>
    %c0_1 = arith.constant 0 : index
    %c0_2 = arith.constant 0 : index
    %1 = vector.load %arg1[%c0_1, %c0_2] : memref<128x128xf32, #tpu.memory_space<vmem>>, vector<128x128xf32>
    %cst = arith.constant dense<0.000000e+00> : vector<10x128xf32>
    %2 = tpu.matmul %0, %1, %cst {dimension_numbers = #tpu.dot_dimension_numbers<[1], [0], [0], [1], [0, 0, 1, 1], [], []>} : vector<10x128xf32>, vector<128x128xf32>, vector<10x128xf32> -> vector<10x128xf32>
    %cst_3 = arith.constant dense<0.000000e+00> : vector<128xf32>
    %3 = vector.multi_reduction <add>, %2, %cst_3 [0] : vector<10x128xf32> to vector<128xf32>
    %4 = vector.shape_cast %3 : vector<128xf32> to vector<1x128xf32>
    %cst_4 = arith.constant 1.000000e-01 : f32
    %5 = vector.broadcast %cst_4 : f32 to vector<1x128xf32>
    %6 = arith.mulf %4, %5 : vector<1x128xf32>
    %7 = arith.mulf %2, %2 : vector<10x128xf32>
    %cst_5 = arith.constant dense<0.000000e+00> : vector<128xf32>
    %8 = vector.multi_reduction <add>, %7, %cst_5 [0] : vector<10x128xf32> to vector<128xf32>
    %9 = vector.shape_cast %8 : vector<128xf32> to vector<1x128xf32>
    %cst_6 = arith.constant 1.000000e-01 : f32
    %10 = vector.broadcast %cst_6 : f32 to vector<1x128xf32>
    %11 = arith.mulf %9, %10 : vector<1x128xf32>
    %12 = arith.mulf %6, %6 : vector<1x128xf32>
    %13 = arith.subf %11, %12 : vector<1x128xf32>
    %cst_7 = arith.constant 0.000000e+00 : f32
    %14 = vector.broadcast %cst_7 : f32 to vector<1x128xf32>
    %15 = arith.maximumf %13, %14 : vector<1x128xf32>
    %c0_8 = arith.constant 0 : index
    %c0_9 = arith.constant 0 : index
    %16 = vector.load %arg2[%c0_8, %c0_9] : memref<1x128xf32, #tpu.memory_space<vmem>>, vector<1x128xf32>
    %cst_10 = arith.constant 9.99999974E-6 : f32
    %17 = vector.broadcast %cst_10 : f32 to vector<1x128xf32>
    %18 = arith.addf %15, %17 : vector<1x128xf32>
    %19 = math.rsqrt %18 : vector<1x128xf32>
    %20 = arith.mulf %16, %19 : vector<1x128xf32>
    %c0_11 = arith.constant 0 : index
    %c0_12 = arith.constant 0 : index
    %21 = vector.load %arg3[%c0_11, %c0_12] : memref<1x128xf32, #tpu.memory_space<vmem>>, vector<1x128xf32>
    %22 = arith.mulf %6, %20 : vector<1x128xf32>
    %23 = arith.subf %21, %22 : vector<1x128xf32>
    %24 = vector.broadcast %20 : vector<1x128xf32> to vector<10x128xf32>
    %25 = arith.mulf %2, %24 : vector<10x128xf32>
    %26 = vector.broadcast %23 : vector<1x128xf32> to vector<10x128xf32>
    %27 = arith.addf %25, %26 : vector<10x128xf32>
    %cst_13 = arith.constant 0.000000e+00 : f32
    %28 = vector.broadcast %cst_13 : f32 to vector<10x128xf32>
    %29 = arith.maximumf %27, %28 : vector<10x128xf32>
    %c0_14 = arith.constant 0 : index
    %c0_15 = arith.constant 0 : index
    %30 = vector.load %arg4[%c0_14, %c0_15] : memref<128x128xf32, #tpu.memory_space<vmem>>, vector<128x128xf32>
    %cst_16 = arith.constant dense<0.000000e+00> : vector<10x128xf32>
    %31 = tpu.matmul %29, %30, %cst_16 {dimension_numbers = #tpu.dot_dimension_numbers<[1], [0], [0], [1], [0, 0, 1, 1], [], []>} : vector<10x128xf32>, vector<128x128xf32>, vector<10x128xf32> -> vector<10x128xf32>
    %cst_17 = arith.constant dense<0.000000e+00> : vector<128xf32>
    %32 = vector.multi_reduction <add>, %31, %cst_17 [0] : vector<10x128xf32> to vector<128xf32>
    %33 = vector.shape_cast %32 : vector<128xf32> to vector<1x128xf32>
    %cst_18 = arith.constant 1.000000e-01 : f32
    %34 = vector.broadcast %cst_18 : f32 to vector<1x128xf32>
    %35 = arith.mulf %33, %34 : vector<1x128xf32>
    %36 = arith.mulf %31, %31 : vector<10x128xf32>
    %cst_19 = arith.constant dense<0.000000e+00> : vector<128xf32>
    %37 = vector.multi_reduction <add>, %36, %cst_19 [0] : vector<10x128xf32> to vector<128xf32>
    %38 = vector.shape_cast %37 : vector<128xf32> to vector<1x128xf32>
    %cst_20 = arith.constant 1.000000e-01 : f32
    %39 = vector.broadcast %cst_20 : f32 to vector<1x128xf32>
    %40 = arith.mulf %38, %39 : vector<1x128xf32>
    %41 = arith.mulf %35, %35 : vector<1x128xf32>
    %42 = arith.subf %40, %41 : vector<1x128xf32>
    %cst_21 = arith.constant 0.000000e+00 : f32
    %43 = vector.broadcast %cst_21 : f32 to vector<1x128xf32>
    %44 = arith.maximumf %42, %43 : vector<1x128xf32>
    %45 = vector.broadcast %35 : vector<1x128xf32> to vector<10x128xf32>
    %46 = arith.subf %31, %45 : vector<10x128xf32>
    %cst_22 = arith.constant 9.99999974E-6 : f32
    %47 = vector.broadcast %cst_22 : f32 to vector<1x128xf32>
    %48 = arith.addf %44, %47 : vector<1x128xf32>
    %49 = math.rsqrt %48 : vector<1x128xf32>
    %50 = vector.broadcast %49 : vector<1x128xf32> to vector<10x128xf32>
    %51 = arith.mulf %46, %50 : vector<10x128xf32>
    %c0_23 = arith.constant 0 : index
    %c0_24 = arith.constant 0 : index
    %52 = vector.load %arg5[%c0_23, %c0_24] : memref<10x128xf32, #tpu.memory_space<vmem>>, vector<10x128xf32>
    tpu.vector_store %arg5[%c0_23, %c0_24], %51 {strides = array<i32>} : memref<10x128xf32, #tpu.memory_space<vmem>>, vector<10x128xf32>,
    return
  }
}

</mosaic_0001>

<llo_original>
// kernel: tpu_custom_call.1
$region0: #{tpu_custom_call.1}
  #allocation0 [shape = 'u32[]', space=smem, size = 0x4, offset = 0x4, fixed_abs, tag = 'smem constant byte address 0x4 - core index']
  #allocation1 [shape = 'u32[144,128]{1,0:T(1,128)}', space=vmem, size = 0x12000, scoped, tag = 'internal scratch']
  %s0 = inlined_call_operand.hbm [shape: f32[10,128], index: 0, kind: input, shape index: {}]
  %s1 = inlined_call_operand.hbm [shape: f32[128,128], index: 1, kind: input, shape index: {}]
  %s2 = inlined_call_operand.vmem [shape: f32[1,128], index: 2, kind: input, shape index: {}]
  %s3 = inlined_call_operand.vmem [shape: f32[1,128], index: 3, kind: input, shape index: {}]
  %s4 = inlined_call_operand.hbm [shape: f32[128,128], index: 4, kind: input, shape index: {}]
  %s5 = inlined_call_operand.hbm [shape: f32[10,128], index: 5, kind: output, shape index: {}]
  %s6 = sld [smem:[#allocation0]]
  $region42: #{tpu_custom_call.1} parent=0
    _
  %s8 = ssub.s32 1, %s6
  %s9 = scalar_select 0, %s8, %s6
  $region1: #{tpu_custom_call.1} parent=0
    #allocation2 [shape = 'u8[8192]{0}', space=vmem, size = 0x2000, scoped, tag = 'input window, operand 0, single buffered']
    #allocation3 [shape = 's32[1]{0}', space=sflag, size = 0x4, scoped, tag = 'scoped memory for tpu_custom_call.1']
    #allocation4 [shape = 's32[1]{0}', space=sflag, size = 0x4, scoped, tag = 'scoped memory for tpu_custom_call.1']
    #allocation5 [shape = 'u8[65536]{0}', space=vmem, size = 0x10000, scoped, tag = 'input window, operand 1, single buffered']
    #allocation6 [shape = 's32[1]{0}', space=sflag, size = 0x4, scoped, tag = 'scoped memory for tpu_custom_call.1']
    #allocation7 [shape = 'u8[65536]{0}', space=vmem, size = 0x10000, scoped, tag = 'input window, operand 4, single buffered']
    #allocation8 [shape = 'u8[8192]{0}', space=vmem, size = 0x2000, scoped, tag = 'output window, operand 0, single buffered']
    %10 = vsyncpa [#allocation3], 0
    %11 = vsyncpa [#allocation6], 0
    %12 = vsyncpa [#allocation4], 0
    // Predicated region
    $region2: #{tpu_custom_call.1} parent=1 // pred_check
      _
    $region3: #{tpu_custom_call.1} parent=1 // pred_check_branch
      %14 = sbr.rel (0) target = $region5
    $region4: #{tpu_custom_call.1} parent=1 // pred_region
      %s16 = ssub.s32 256, 256
      %17 = vsyncadd [#allocation3], %s16
      %s18 = sshll.u32 [#allocation2], 4
      %s19 = int_to_ptr.vmem [resolvable:$true] %s18
      %24 = dma.hbm_to_vmem [thread:$0]  %s0, 256, %s19, [#allocation3], 128, 128, 8
    $region5: #{tpu_custom_call.1} parent=1 // pred_fallthru
      _
    // Predicated region
    $region6: #{tpu_custom_call.1} parent=1 // pred_check
      _
    $region7: #{tpu_custom_call.1} parent=1 // pred_check_branch
      %26 = sbr.rel (0) target = $region9
    $region8: #{tpu_custom_call.1} parent=1 // pred_region
      %s28 = ssub.s32 2048, 2048
      %29 = vsyncadd [#allocation6], %s28
      %s30 = sshll.u32 [#allocation5], 4
      %s31 = int_to_ptr.vmem [resolvable:$true] %s30
      %36 = dma.hbm_to_vmem [thread:$0]  %s1, 2048, %s31, [#allocation6], 128, 128, 8
    $region9: #{tpu_custom_call.1} parent=1 // pred_fallthru
      _
    // Predicated region
    $region10: #{tpu_custom_call.1} parent=1 // pred_check
      _
    $region11: #{tpu_custom_call.1} parent=1 // pred_check_branch
      %38 = sbr.rel (0) target = $region13
    $region12: #{tpu_custom_call.1} parent=1 // pred_region
      _
    $region13: #{tpu_custom_call.1} parent=1 // pred_fallthru
      _
    // Predicated region
    $region14: #{tpu_custom_call.1} parent=1 // pred_check
      _
    $region15: #{tpu_custom_call.1} parent=1 // pred_check_branch
      %40 = sbr.rel (0) target = $region17
    $region16: #{tpu_custom_call.1} parent=1 // pred_region
      _
    $region17: #{tpu_custom_call.1} parent=1 // pred_fallthru
      _
    // Predicated region
    $region18: #{tpu_custom_call.1} parent=1 // pred_check
      _
    $region19: #{tpu_custom_call.1} parent=1 // pred_check_branch
      %42 = sbr.rel (0) target = $region21
    $region20: #{tpu_custom_call.1} parent=1 // pred_region
      %s44 = ssub.s32 2048, 2048
      %45 = vsyncadd [#allocation6], %s44
      %s46 = sshll.u32 [#allocation7], 4
      %s47 = int_to_ptr.vmem [resolvable:$true] %s46
      %52 = dma.hbm_to_vmem [thread:$0]  %s4, 2048, %s47, [#allocation6], 128, 128, 8
    $region21: #{tpu_custom_call.1} parent=1 // pred_fallthru
      _
    // Predicated region
    $region22: #{tpu_custom_call.1} parent=1 // pred_check
      _
    $region23: #{tpu_custom_call.1} parent=1 // pred_check_branch
      %54 = sbr.rel (0) target = $region25
    $region24: #{tpu_custom_call.1} parent=1 // pred_region
      %55 = dma.done [#allocation3], 256
    $region25: #{tpu_custom_call.1} parent=1 // pred_fallthru
      _
    // Predicated region
    $region26: #{tpu_custom_call.1} parent=1 // pred_check
      _
    $region27: #{tpu_custom_call.1} parent=1 // pred_check_branch
      %57 = sbr.rel (0) target = $region29
    $region28: #{tpu_custom_call.1} parent=1 // pred_region
      %58 = dma.done [#allocation6], 2048
    $region29: #{tpu_custom_call.1} parent=1 // pred_fallthru
      _
    // Predicated region
    $region30: #{tpu_custom_call.1} parent=1 // pred_check
      _
    $region31: #{tpu_custom_call.1} parent=1 // pred_check_branch
      %60 = sbr.rel (0) target = $region33
    $region32: #{tpu_custom_call.1} parent=1 // pred_region
      %61 = dma.done [#allocation6], 2048
    $region33: #{tpu_custom_call.1} parent=1 // pred_fallthru
      _
    %v62 = vld [vmem:[#allocation2] sm:$0xff]
    %v63 = vld [vmem:[#allocation2 + $0x8] sm:$0x3]
    %v64 = vld [vmem:[#allocation5] sm:$0xff]
    %v65 = vld [vmem:[#allocation5 + $0x8] sm:$0xff]
    %v66 = vld [vmem:[#allocation5 + $0x10] sm:$0xff]
    %v67 = vld [vmem:[#allocation5 + $0x18] sm:$0xff]
    %v68 = vld [vmem:[#allocation5 + $0x20] sm:$0xff]
    %v69 = vld [vmem:[#allocation5 + $0x28] sm:$0xff]
    %v70 = vld [vmem:[#allocation5 + $0x30] sm:$0xff]
    %v71 = vld [vmem:[#allocation5 + $0x38] sm:$0xff]
    %v72 = vld [vmem:[#allocation5 + $0x40] sm:$0xff]
    %v73 = vld [vmem:[#allocation5 + $0x48] sm:$0xff]
    %v74 = vld [vmem:[#allocation5 + $0x50] sm:$0xff]
    %v75 = vld [vmem:[#allocation5 + $0x58] sm:$0xff]
    %v76 = vld [vmem:[#allocation5 + $0x60] sm:$0xff]
    %v77 = vld [vmem:[#allocation5 + $0x68] sm:$0xff]
    %v78 = vld [vmem:[#allocation5 + $0x70] sm:$0xff]
    %v79 = vld [vmem:[#allocation5 + $0x78] sm:$0xff]
    %80 = vmatprep.subr.mxu0 0.0
    %81 = vmatpush1.msra.mxu0 %v79
    %82 = vmatprep.subr.mxu0 0.0
    %83 = vmatpush1.msra.mxu0 %v78
    %84 = vmatprep.subr.mxu0 0.0
    %85 = vmatpush1.msra.mxu0 %v77
    %86 = vmatprep.subr.mxu0 0.0
    %87 = vmatpush1.msra.mxu0 %v76
    %88 = vmatprep.subr.mxu0 0.0
    %89 = vmatpush1.msra.mxu0 %v75
    %90 = vmatprep.subr.mxu0 0.0
    %91 = vmatpush1.msra.mxu0 %v74
    %92 = vmatprep.subr.mxu0 0.0
    %93 = vmatpush1.msra.mxu0 %v73
    %94 = vmatprep.subr.mxu0 0.0
    %95 = vmatpush1.msra.mxu0 %v72
    %96 = vmatprep.subr.mxu0 0.0
    %97 = vmatpush1.msra.mxu0 %v71
    %98 = vmatprep.subr.mxu0 0.0
    %99 = vmatpush1.msra.mxu0 %v70
    %100 = vmatprep.subr.mxu0 0.0
    %101 = vmatpush1.msra.mxu0 %v69
    %102 = vmatprep.subr.mxu0 0.0
    %103 = vmatpush1.msra.mxu0 %v68
    %104 = vmatprep.subr.mxu0 0.0
    %105 = vmatpush1.msra.mxu0 %v67
    %106 = vmatprep.subr.mxu0 0.0
    %107 = vmatpush1.msra.mxu0 %v66
    %108 = vmatprep.subr.mxu0 0.0
    %109 = vmatpush1.msra.mxu0 %v65
    %110 = vmatprep.subr.mxu0 0.0
    %111 = vmatpush1.msra.mxu0 %v64
    %112 = vmatprep.subr.mxu0 0.0
    %113 = vmatpush2.msra.mxu0 0.0
    %114 = vmatprep.subr.mxu0 0.0
    %115 = vmatpush2.msra.mxu0 0.0
    %116 = vmatprep.subr.mxu0 0.0
    %117 = vmatpush2.msra.mxu0 0.0
    %118 = vmatprep.subr.mxu0 0.0
    %119 = vmatpush2.msra.mxu0 0.0
    %120 = vmatprep.subr.mxu0 0.0
    %121 = vmatpush2.msra.mxu0 0.0
    %122 = vmatprep.subr.mxu0 0.0
    %123 = vmatpush2.msra.mxu0 0.0
    %124 = vmatprep.subr.mxu0 0.0
    %125 = vmatpush2.msra.mxu0 0.0
    %126 = vmatprep.subr.mxu0 0.0
    %127 = vmatpush2.msra.mxu0 0.0
    %128 = vmatprep.subr.mxu0 0.0
    %129 = vmatpush2.msra.mxu0 0.0
    %130 = vmatprep.subr.mxu0 0.0
    %131 = vmatpush2.msra.mxu0 0.0
    %132 = vmatprep.subr.mxu0 0.0
    %133 = vmatpush2.msra.mxu0 0.0
    %134 = vmatprep.subr.mxu0 0.0
    %135 = vmatpush2.msra.mxu0 0.0
    %136 = vmatprep.subr.mxu0 0.0
    %137 = vmatpush2.msra.mxu0 0.0
    %138 = vmatprep.subr.mxu0 0.0
    %139 = vmatpush2.msra.mxu0 0.0
    %140 = vmatprep.subr.mxu0 0.0
    %141 = vmatpush2.msra.mxu0 0.0
    %142 = vmatprep.subr.mxu0 0.0
    %143 = vmatpush2.msra.mxu0 0.0
    %144 = vmatprep.mubr.f32.mxu0 0.0
    %145 = vmatmul.mubr.f32.gmra.mxu0 %v62
    %v146 = vpop.f32.mrf.mxu0
    %v147 = vadd.f32 0.0, %v146
    %v148 = vpop.f32.mrf.mxu0
    %149 = vmatprep.mubr.f32.mxu0 0.0
    %150 = vmatmul.mubr.f32.gmra.mxu0 %v63
    %v151 = vpop.f32.mrf.mxu0
    %v152 = vadd.f32 0.0, %v151
    %v153 = vpop.f32.mrf.mxu0
    %154 = vdwg.mxu0
    %vm155 = vcmask 1041408
    %v156 = vsel %vm155, %v152, 0.0
    %v157 = vadd.f32 %v147, %v156
    %v158 = vrot.slane %v157, 4
    %v159 = vadd.f32 %v157, %v158
    %v160 = vrot.slane %v159, 2
    %v161 = vadd.f32 %v159, %v160
    %v162 = vrot.slane %v161, 1
    %v163 = vadd.f32 %v161, %v162
    %v164 = vmul.f32 %v163, 0.1
    %v165 = vmul.f32 %v147, %v147
    %v166 = vmul.f32 %v152, %v152
    %v167 = vsel %vm155, %v166, 0.0
    %v168 = vadd.f32 %v165, %v167
    %v169 = vrot.slane %v168, 4
    %v170 = vadd.f32 %v168, %v169
    %v171 = vrot.slane %v170, 2
    %v172 = vadd.f32 %v170, %v171
    %v173 = vrot.slane %v172, 1
    %v174 = vadd.f32 %v172, %v173
    %v175 = vmul.f32 %v174, 0.1
    %v176 = vmul.f32 %v164, %v164
    %v177 = vsub.f32 %v175, %v176
    %v178 = vmax.f32 %v177, 0.0
    %v179 = vld [vmem:[%s2] sm:$0x1]
    %v180 = vadd.f32 %v178, 1e-05
    %v181 = vrsqrt.pop %v180
    %v182 = vmul.f32 %v179, %v181
    %v183 = vld [vmem:[%s3] sm:$0x1]
    %v184 = vmul.f32 %v164, %v182
    %v185 = vsub.f32 %v183, %v184
    %v187 = vlaneseq
    %v188 = vshrl.u32 %v187, 7
    %v189 = vsub.s32 0, %v188
    %v190 = vrot.slane %v182, %v189
    %v192 = vmul.f32 %v147, %v190
    %v193 = vmul.f32 %v152, %v190
    %v195 = vlaneseq
    %v196 = vshrl.u32 %v195, 7
    %v197 = vsub.s32 0, %v196
    %v198 = vrot.slane %v185, %v197
    %v200 = vadd.f32 %v192, %v198
    %v201 = vadd.f32 %v193, %v198
    %v202 = vmax.f32 %v200, 0.0
    %v203 = vmax.f32 %v201, 0.0
    %v204 = vld [vmem:[#allocation7] sm:$0xff]
    %v205 = vld [vmem:[#allocation7 + $0x8] sm:$0xff]
    %v206 = vld [vmem:[#allocation7 + $0x10] sm:$0xff]
    %v207 = vld [vmem:[#allocation7 + $0x18] sm:$0xff]
    %v208 = vld [vmem:[#allocation7 + $0x20] sm:$0xff]
    %v209 = vld [vmem:[#allocation7 + $0x28] sm:$0xff]
    %v210 = vld [vmem:[#allocation7 + $0x30] sm:$0xff]
    %v211 = vld [vmem:[#allocation7 + $0x38] sm:$0xff]
    %v212 = vld [vmem:[#allocation7 + $0x40] sm:$0xff]
    %v213 = vld [vmem:[#allocation7 + $0x48] sm:$0xff]
    %v214 = vld [vmem:[#allocation7 + $0x50] sm:$0xff]
    %v215 = vld [vmem:[#allocation7 + $0x58] sm:$0xff]
    %v216 = vld [vmem:[#allocation7 + $0x60] sm:$0xff]
    %v217 = vld [vmem:[#allocation7 + $0x68] sm:$0xff]
    %v218 = vld [vmem:[#allocation7 + $0x70] sm:$0xff]
    %v219 = vld [vmem:[#allocation7 + $0x78] sm:$0xff]
    %220 = vmatprep.subr.mxu0 0.0
    %221 = vmatpush1.msra.mxu0 %v219
    %222 = vmatprep.subr.mxu0 0.0
    %223 = vmatpush1.msra.mxu0 %v218
    %224 = vmatprep.subr.mxu0 0.0
    %225 = vmatpush1.msra.mxu0 %v217
    %226 = vmatprep.subr.mxu0 0.0
    %227 = vmatpush1.msra.mxu0 %v216
    %228 = vmatprep.subr.mxu0 0.0
    %229 = vmatpush1.msra.mxu0 %v215
    %230 = vmatprep.subr.mxu0 0.0
    %231 = vmatpush1.msra.mxu0 %v214
    %232 = vmatprep.subr.mxu0 0.0
    %233 = vmatpush1.msra.mxu0 %v213
    %234 = vmatprep.subr.mxu0 0.0
    %235 = vmatpush1.msra.mxu0 %v212
    %236 = vmatprep.subr.mxu0 0.0
    %237 = vmatpush1.msra.mxu0 %v211
    %238 = vmatprep.subr.mxu0 0.0
    %239 = vmatpush1.msra.mxu0 %v210
    %240 = vmatprep.subr.mxu0 0.0
    %241 = vmatpush1.msra.mxu0 %v209
    %242 = vmatprep.subr.mxu0 0.0
    %243 = vmatpush1.msra.mxu0 %v208
    %244 = vmatprep.subr.mxu0 0.0
    %245 = vmatpush1.msra.mxu0 %v207
    %246 = vmatprep.subr.mxu0 0.0
    %247 = vmatpush1.msra.mxu0 %v206
    %248 = vmatprep.subr.mxu0 0.0
    %249 = vmatpush1.msra.mxu0 %v205
    %250 = vmatprep.subr.mxu0 0.0
    %251 = vmatpush1.msra.mxu0 %v204
    %252 = vmatprep.subr.mxu0 0.0
    %253 = vmatpush2.msra.mxu0 0.0
    %254 = vmatprep.subr.mxu0 0.0
    %255 = vmatpush2.msra.mxu0 0.0
    %256 = vmatprep.subr.mxu0 0.0
    %257 = vmatpush2.msra.mxu0 0.0
    %258 = vmatprep.subr.mxu0 0.0
    %259 = vmatpush2.msra.mxu0 0.0
    %260 = vmatprep.subr.mxu0 0.0
    %261 = vmatpush2.msra.mxu0 0.0
    %262 = vmatprep.subr.mxu0 0.0
    %263 = vmatpush2.msra.mxu0 0.0
    %264 = vmatprep.subr.mxu0 0.0
    %265 = vmatpush2.msra.mxu0 0.0
    %266 = vmatprep.subr.mxu0 0.0
    %267 = vmatpush2.msra.mxu0 0.0
    %268 = vmatprep.subr.mxu0 0.0
    %269 = vmatpush2.msra.mxu0 0.0
    %270 = vmatprep.subr.mxu0 0.0
    %271 = vmatpush2.msra.mxu0 0.0
    %272 = vmatprep.subr.mxu0 0.0
    %273 = vmatpush2.msra.mxu0 0.0
    %274 = vmatprep.subr.mxu0 0.0
    %275 = vmatpush2.msra.mxu0 0.0
    %276 = vmatprep.subr.mxu0 0.0
    %277 = vmatpush2.msra.mxu0 0.0
    %278 = vmatprep.subr.mxu0 0.0
    %279 = vmatpush2.msra.mxu0 0.0
    %280 = vmatprep.subr.mxu0 0.0
    %281 = vmatpush2.msra.mxu0 0.0
    %282 = vmatprep.subr.mxu0 0.0
    %283 = vmatpush2.msra.mxu0 0.0
    %284 = vmatprep.mubr.f32.mxu0 0.0
    %285 = vmatmul.mubr.f32.gmra.mxu0 %v202
    %v286 = vpop.f32.mrf.mxu0
    %v287 = vadd.f32 0.0, %v286
    %v288 = vpop.f32.mrf.mxu0
    %289 = vmatprep.mubr.f32.mxu0 0.0
    %290 = vmatmul.mubr.f32.gmra.mxu0 %v203
    %v291 = vpop.f32.mrf.mxu0
    %v292 = vadd.f32 0.0, %v291
    %v293 = vpop.f32.mrf.mxu0
    %294 = vdwg.mxu0
    %v295 = vsel %vm155, %v292, 0.0
    %v296 = vadd.f32 %v287, %v295
    %v297 = vrot.slane %v296, 4
    %v298 = vadd.f32 %v296, %v297
    %v299 = vrot.slane %v298, 2
    %v300 = vadd.f32 %v298, %v299
    %v301 = vrot.slane %v300, 1
    %v302 = vadd.f32 %v300, %v301
    %v303 = vmul.f32 %v302, 0.1
    %v304 = vmul.f32 %v287, %v287
    %v305 = vmul.f32 %v292, %v292
    %v306 = vsel %vm155, %v305, 0.0
    %v307 = vadd.f32 %v304, %v306
    %v308 = vrot.slane %v307, 4
    %v309 = vadd.f32 %v307, %v308
    %v310 = vrot.slane %v309, 2
    %v311 = vadd.f32 %v309, %v310
    %v312 = vrot.slane %v311, 1
    %v313 = vadd.f32 %v311, %v312
    %v314 = vmul.f32 %v313, 0.1
    %v315 = vmul.f32 %v303, %v303
    %v316 = vsub.f32 %v314, %v315
    %v317 = vmax.f32 %v316, 0.0
    %v318 = vsub.f32 %v287, %v303
    %v319 = vsub.f32 %v292, %v303
    %v320 = vadd.f32 %v317, 1e-05
    %v321 = vrsqrt.pop %v320
    %v322 = vmul.f32 %v318, %v321
    %v323 = vmul.f32 %v319, %v321
    %324 = vst [vmem:[#allocation8] sm:$0xff] %v322
    %325 = vst [vmem:[#allocation8 + $0x8] sm:$0x3] %v323
    // Predicated region
    $region34: #{tpu_custom_call.1} parent=1 // pred_check
      _
    $region35: #{tpu_custom_call.1} parent=1 // pred_check_branch
      %327 = sbr.rel (0) target = $region37
    $region36: #{tpu_custom_call.1} parent=1 // pred_region
      %s329 = ssub.s32 256, 256
      %330 = vsyncadd [#allocation4], %s329
      %s331 = sshll.u32 [#allocation8], 4
      %s332 = int_to_ptr.vmem [resolvable:$true] %s331
      %337 = dma.vmem_to_hbm [thread:$0]  %s332, 256, %s5, [#allocation4], 128, 128, 8
    $region37: #{tpu_custom_call.1} parent=1 // pred_fallthru
      _
    // Predicated region
    $region38: #{tpu_custom_call.1} parent=1 // pred_check
      _
    $region39: #{tpu_custom_call.1} parent=1 // pred_check_branch
      %339 = sbr.rel (0) target = $region41
    $region40: #{tpu_custom_call.1} parent=1 // pred_region
      %340 = dma.done [#allocation4], 256
    $region41: #{tpu_custom_call.1} parent=1 // pred_fallthru
      _
    %341 = vsyncpa [#allocation3], 1
    %342 = vsyncpa [#allocation6], 1
    %343 = vsyncpa [#allocation4], 1

</llo_original>
